<compile_context>
chip_gen: v6e
topology: v6e:2x2x1
jax: 0.10.0
libtpu: 0.0.40
codegen_flags: <defaults>
</compile_context>

<pallas_src>
import functools
import math

import jax
import jax.numpy as jnp
import numpy as np
from jax.experimental import pallas as pl
from jax.experimental.pallas import tpu as pltpu


def _round_up(x, m):
    return (x + m - 1) // m * m


# ----------------------------------------------------------------------------
# In-kernel elementwise helpers (built only from primitives Mosaic lowers).
# ----------------------------------------------------------------------------
def _sigmoid(x):
    return 1.0 / (1.0 + jnp.exp(-x))


def _silu(x):
    return x * _sigmoid(x)


def _log_sigmoid(x):
    # log(sigmoid(x)) = min(x, 0) - log(1 + exp(-|x|)); never -inf for finite x.
    return jnp.minimum(x, 0.0) - jnp.log(1.0 + jnp.exp(-jnp.abs(x)))


# ----------------------------------------------------------------------------
# Tiled linear kernel: y = act(x @ W^T), bf16 MXU operands, fp32 accumulation.
# ----------------------------------------------------------------------------
def _linear_kernel(x_ref, w_ref, o_ref, acc_ref, *, activation):
    @pl.when(pl.program_id(2) == 0)
    def _():
        acc_ref[...] = jnp.zeros_like(acc_ref)

    acc_ref[...] += jax.lax.dot_general(
        x_ref[...].astype(jnp.bfloat16),
        w_ref[...].astype(jnp.bfloat16),
        dimension_numbers=(((1,), (1,)), ((), ())),
        preferred_element_type=jnp.float32,
    )

    @pl.when(pl.program_id(2) == pl.num_programs(2) - 1)
    def _():
        acc = acc_ref[...]
        if activation == "silu":
            acc = _silu(acc)
        elif activation == "sigmoid":
            acc = _sigmoid(acc)
        elif activation == "logsigmoid":
            acc = _log_sigmoid(acc)
        o_ref[...] = acc.astype(o_ref.dtype)


def pallas_linear(x, w, activation=None, tm=256, tn=256, tk=512):
    """x: (..., K); w: (N_out, K) (PyTorch Linear layout) -> act(x @ w.T)."""
    lead = x.shape[:-1]
    K = x.shape[-1]
    x2 = x.reshape(-1, K)
    M = x2.shape[0]
    Nout = w.shape[0]

    tm = min(tm, _round_up(M, 8))
    tn = min(tn, _round_up(Nout, 128))
    tk = min(tk, _round_up(K, 128))
    Mp, Np_, Kp = _round_up(M, tm), _round_up(Nout, tn), _round_up(K, tk)
    if (Mp, Kp) != (M, K):
        x2 = jnp.pad(x2, ((0, Mp - M), (0, Kp - K)))
    if (Np_, Kp) != (Nout, K):
        w = jnp.pad(w, ((0, Np_ - Nout), (0, Kp - K)))

    grid = (Mp // tm, Np_ // tn, Kp // tk)
    y = pl.pallas_call(
        functools.partial(_linear_kernel, activation=activation),
        out_shape=jax.ShapeDtypeStruct((Mp, Np_), x.dtype),
        grid_spec=pltpu.PrefetchScalarGridSpec(
            num_scalar_prefetch=0,
            grid=grid,
            in_specs=[
                pl.BlockSpec((tm, tk), lambda i, j, k: (i, k)),
                pl.BlockSpec((tn, tk), lambda i, j, k: (j, k)),
            ],
            out_specs=pl.BlockSpec((tm, tn), lambda i, j, k: (i, j)),
            scratch_shapes=[pltpu.VMEM((tm, tn), jnp.float32)],
        ),
        compiler_params=pltpu.CompilerParams(
            dimension_semantics=("parallel", "parallel", "arbitrary"),
            vmem_limit_bytes=32 * 1024 * 1024,
        ),
        cost_estimate=pl.CostEstimate(
            flops=2 * Mp * Np_ * Kp,
            transcendentals=Mp * Np_ if activation else 0,
            bytes_accessed=4 * (Mp * Kp + Np_ * Kp + Mp * Np_),
        ),
    )(x2, w)
    return y[:M, :Nout].reshape(*lead, Nout)


# ----------------------------------------------------------------------------
# Chunked gated linear attention (hgrn2 / chunk_gla semantics, scale=1).
# ----------------------------------------------------------------------------
def _shift_down(x, s):
    """Rows shifted down by s along axis 0, zero-filled at the top."""
    return jnp.concatenate(
        [jnp.zeros((s,) + x.shape[1:], x.dtype), x[: x.shape[0] - s]], axis=0)


def _inclusive_cumsum_rows(x):
    """Inclusive prefix sum along axis 0 via a log-depth shift+add scan."""
    n = x.shape[0]
    out = x
    s = 1
    while s < n:
        out = out + _shift_down(out, s)
        s *= 2
    return out


def _gla_kernel(q_ref, k_ref, v_ref, g_ref, o_ref, s_ref, *, sub_chunk):
    """One (batch, head, chunk) grid step of chunked gated linear attention.

    Recurrence (per head): S_t = diag(exp(g_t)) S_{t-1} + k_t^T v_t,  o_t = q_t S_t.
    The state is carried across the chunk axis as S^T (D, E) in fp32 VMEM scratch;
    within a chunk we loop over sub-chunks using within-sub-chunk relative decays
    so every exponent stays bounded by the sub-chunk length.
    """
    C, E = q_ref.shape
    D = v_ref.shape[1]
    T = sub_chunk
    n_sub = C // T

    @pl.when(pl.program_id(2) == 0)
    def _():
        s_ref[...] = jnp.zeros_like(s_ref)

    row = jax.lax.broadcasted_iota(jnp.int32, (T, T), 0)
    col = jax.lax.broadcasted_iota(jnp.int32, (T, T), 1)
    causal = row >= col

    for s in range(n_sub):
        sl = pl.ds(s * T, T)
        q = q_ref[sl, :].astype(jnp.float32)
        k = k_ref[sl, :].astype(jnp.float32)
        v = v_ref[sl, :].astype(jnp.float32)
        g = g_ref[sl, :].astype(jnp.float32)

        b = _inclusive_cumsum_rows(g)                  # (T, E) cumulative log-decay
        b_tot = b[T - 1:T, :]                          # (1, E) total sub-chunk decay

        q_d = q * jnp.exp(b)                           # exponent <= 0 -> safe
        # exponent bounded by the sub-chunk; clamp guards the (extreme) case so a
        # 0 * inf NaN can never reach the matmul.
        k_in = k * jnp.exp(jnp.minimum(-b, 80.0))
        k_out = k * jnp.exp(b_tot - b)                 # exponent <= 0 -> safe

        st = s_ref[...]                                # (D, E) = S^T, fp32

        # inter-chunk: (q_t * exp(b_t)) @ S_prev
        o_inter = jax.lax.dot_general(
            q_d.astype(jnp.bfloat16), st.astype(jnp.bfloat16),
            dimension_numbers=(((1,), (1,)), ((), ())),
            preferred_element_type=jnp.float32)        # (T, D)

        # intra-chunk causal attention
        att = jax.lax.dot_general(
            q_d.astype(jnp.bfloat16), k_in.astype(jnp.bfloat16),
            dimension_numbers=(((1,), (1,)), ((), ())),
            preferred_element_type=jnp.float32)        # (T, T)
        att = jnp.where(causal, att, 0.0)
        o = o_inter + jax.lax.dot_general(
            att.astype(jnp.bfloat16), v.astype(jnp.bfloat16),
            dimension_numbers=(((1,), (0,)), ((), ())),
            preferred_element_type=jnp.float32)        # (T, D)

        # state update: S^T <- S^T * exp(b_tot) + v^T (k * exp(b_tot - b))
        s_ref[...] = st * jnp.exp(b_tot) + jax.lax.dot_general(
            v.astype(jnp.bfloat16), k_out.astype(jnp.bfloat16),
            dimension_numbers=(((0,), (0,)), ((), ())),
            preferred_element_type=jnp.float32)        # (D, E)

        o_ref[sl, :] = o.astype(o_ref.dtype)


def gla_attention(q, k, v, log_f, chunk_size=128, sub_chunk=64):
    """q, k, log_f: (B, N, H, E); v: (B, N, H, D) -> (B, N, H, D)."""
    B, N, H, E = q.shape
    D = v.shape[-1]

    C = min(_round_up(chunk_size, 8), _round_up(N, 8))
    T = math.gcd(C, max(8, _round_up(sub_chunk, 8)))
    Np = _round_up(N, C)
    nc = Np // C
    if Np != N:
        pad = ((0, 0), (0, Np - N), (0, 0), (0, 0))
        q, k, v, log_f = (jnp.pad(t, pad) for t in (q, k, v, log_f))

    kernel = functools.partial(_gla_kernel, sub_chunk=T)
    grid = (B, H, nc)
    cparams = pltpu.CompilerParams(
        dimension_semantics=("parallel", "parallel", "arbitrary"),
        vmem_limit_bytes=32 * 1024 * 1024)
    cost = pl.CostEstimate(
        flops=2 * B * H * Np * (2 * E * D + T * (E + D)),
        transcendentals=3 * B * H * Np * E,
        bytes_accessed=4 * B * Np * H * (3 * E + 2 * D))
    scratch = [pltpu.VMEM((D, E), jnp.float32)]

    lane_dense = (E % 128 == 0) and (D % 128 == 0)
    if lane_dense:
        # Transpose-free path: keep the native head-flattened (B, N, H*E)/(B, N, H*D)
        # layout; the per-head (C, E)/(C, D) tile is picked via the last-axis block
        # index, and every block is lane-dense (last dim multiple of 128).
        qf, kf, gf = (t.reshape(B, Np, H * E) for t in (q, k, log_f))
        vf = v.reshape(B, Np, H * D)
        qk_spec = pl.BlockSpec((None, C, E), lambda b, h, c: (b, c, h))
        vo_spec = pl.BlockSpec((None, C, D), lambda b, h, c: (b, c, h))
        out = pl.pallas_call(
            kernel,
            out_shape=jax.ShapeDtypeStruct((B, Np, H * D), q.dtype),
            grid_spec=pltpu.PrefetchScalarGridSpec(
                num_scalar_prefetch=0, grid=grid,
                in_specs=[qk_spec, qk_spec, vo_spec, qk_spec],
                out_specs=vo_spec, scratch_shapes=scratch),
            compiler_params=cparams, cost_estimate=cost,
        )(qf, kf, vf, gf)
        return out[:, :N, :].reshape(B, N, H, D)

    # Fallback for small / non-128-aligned head dims: (B, H, N, E) layout.
    qt, kt, gt = (jnp.transpose(t, (0, 2, 1, 3)) for t in (q, k, log_f))
    vt = jnp.transpose(v, (0, 2, 1, 3))
    qk_spec = pl.BlockSpec((None, None, C, E), lambda b, h, c: (b, h, c, 0))
    vo_spec = pl.BlockSpec((None, None, C, D), lambda b, h, c: (b, h, c, 0))
    out = pl.pallas_call(
        kernel,
        out_shape=jax.ShapeDtypeStruct((B, H, Np, D), q.dtype),
        grid_spec=pltpu.PrefetchScalarGridSpec(
            num_scalar_prefetch=0, grid=grid,
            in_specs=[qk_spec, qk_spec, vo_spec, qk_spec],
            out_specs=vo_spec, scratch_shapes=scratch),
        compiler_params=cparams, cost_estimate=cost,
    )(qt, kt, vt, gt)
    return jnp.transpose(out[:, :, :N, :], (0, 2, 1, 3))


# ----------------------------------------------------------------------------
# Module glue (plain JAX): LRPE, gated group RMSNorm, params, forward.
# ----------------------------------------------------------------------------
def lrpe_cosine(x, base=10000.0, offset=0):
    # Lrpe with lrpe_type=6: cosine positional reweighting; doubles head dim.
    b, n, h, d = x.shape
    theta = base ** (-2.0 * jnp.arange(d, dtype=jnp.float32) / d)
    idx = jnp.arange(n, dtype=jnp.float32) + offset
    ang = (idx[:, None] * theta[None, :])[None, :, None, :]
    return jnp.concatenate([x * jnp.cos(ang), x * jnp.sin(ang)], axis=-1)


def gated_group_rmsnorm(x, gate_sig, weight, num_groups, eps=1e-6):
    # 'rmsnorm_fused_gate' (gate_act='sigmoid', gate_pos='pre', num_groups=heads);
    # the sigmoid is already fused into the gate projection epilogue.
    b, n, d = x.shape
    gd = d // num_groups
    xg = (x * gate_sig).reshape(b, n, num_groups, gd)
    inv = jax.lax.rsqrt(jnp.mean(jnp.square(xg), axis=-1, keepdims=True) + eps)
    return (xg * inv).reshape(b, n, d) * weight


def init_params(key, embed_dim, num_heads):
    head_dim = embed_dim // num_heads
    ks = jax.random.split(key, 8)

    def lin(k, out_dim, in_dim):
        return (jax.random.normal(k, (out_dim, in_dim), jnp.float32)
                / jnp.sqrt(jnp.float32(in_dim)))

    return dict(
        wq=lin(ks[0], embed_dim, embed_dim),
        wk=lin(ks[1], embed_dim, embed_dim),
        wv=lin(ks[2], embed_dim, embed_dim),
        wo=lin(ks[3], embed_dim, embed_dim),
        wf1=lin(ks[4], head_dim, embed_dim),   # f_proj[0]
        wf2=lin(ks[5], embed_dim, head_dim),   # f_proj[1]
        wg1=lin(ks[6], head_dim, embed_dim),   # output_gate[0]
        wg2=lin(ks[7], embed_dim, head_dim),   # output_gate[1]
        norm_w=jnp.ones((embed_dim,), jnp.float32),
    )


def compute_qkv_decay(x, params, num_heads):
    b, n, d = x.shape
    head_dim = d // num_heads
    # q/k projections with fused SiLU epilogue; decay projection with fused
    # log-sigmoid epilogue (== log(sigmoid(.)), numerically stable, no -inf).
    q = pallas_linear(x, params["wq"], activation="silu")
    k = pallas_linear(x, params["wk"], activation="silu")
    v = pallas_linear(x, params["wv"])
    log_f = pallas_linear(pallas_linear(x, params["wf1"]), params["wf2"],
                          activation="logsigmoid")

    def heads(t):
        return t.reshape(b, n, num_heads, head_dim)

    q, k, v, log_f = map(heads, (q, k, v, log_f))
    # use_lrpe: cosine LRPE doubles q/k feature dim; decay tiled ('d -> (2 d)').
    q = lrpe_cosine(q)
    k = lrpe_cosine(k)
    log_f = jnp.concatenate([log_f, log_f], axis=-1)
    return q, k, v, log_f


def decay_linear_attention_forward(x, params, num_heads, chunk_size=128, sub_chunk=64):
    # TODO(synk): attention_mask / past_key_values cache / lower_bound paths not
    # implemented (this is the training-style chunked forward with mask=None).
    b, n, d = x.shape
    q, k, v, log_f = compute_qkv_decay(x, params, num_heads)
    o = gla_attention(q, k, v, log_f, chunk_size=chunk_size, sub_chunk=sub_chunk)
    o = o.reshape(b, n, d)
    gate_sig = pallas_linear(pallas_linear(x, params["wg1"]), params["wg2"],
                             activation="sigmoid")
    o = gated_group_rmsnorm(o, gate_sig, params["norm_w"], num_groups=num_heads)
    return pallas_linear(o, params["wo"])


# ----------------------------------------------------------------------------
# Pure-JAX recurrence reference for the attention core (sanity check).
# ----------------------------------------------------------------------------
def gla_reference(q, k, v, log_f):
    B, N, H, E = q.shape
    qs, ks, vs, gs = (jnp.moveaxis(t, 1, 0) for t in (q, k, v, log_f))
    S0 = jnp.zeros((B, H, E, v.shape[-1]), jnp.float32)

    def step(S, inp):
        qt, kt, vt, gt = inp
        S = S * jnp.exp(gt)[..., None] + kt[..., None] * vt[..., None, :]
        ot = jnp.einsum("bhe,bhed->bhd", qt, S)
        return S, ot

    _, outs = jax.lax.scan(step, S0, (qs, ks, vs, gs))
    return jnp.moveaxis(outs, 0, 1)


if __name__ == "__main__":
    # head_dim = 128 -> lane-dense transpose-free GLA layout; chunk 16 / sub 8
    # force multi-chunk state carry and the in-kernel sub-chunk loop.
    B, N, EMBED, HEADS = 2, 32, 256, 2
    CHUNK, SUB = 16, 8
    key = jax.random.PRNGKey(0)
    kx, kp = jax.random.split(key)
    x = jax.random.normal(kx, (B, N, EMBED), jnp.float32)
    params = init_params(kp, EMBED, HEADS)

    out = decay_linear_attention_forward(x, params, HEADS,
                                         chunk_size=CHUNK, sub_chunk=SUB)
    out = jax.block_until_ready(out)
    assert out.shape == (B, N, EMBED)
    assert bool(jnp.all(jnp.isfinite(out)))

    def check(got, want, tag):
        got = np.asarray(got)
        want = np.asarray(want)
        tol = 3e-2 * (float(np.max(np.abs(want))) + 1.0)   # bf16-MXU tolerance
        err = float(np.max(np.abs(got - want)))
        assert np.isfinite(err) and err <= tol, f"{tag}: max err {err} > {tol}"

    # Chunked Pallas GLA vs pure-JAX recurrence (lane-dense path, state carry).
    q4, k4, v4, g4 = compute_qkv_decay(x, params, HEADS)
    got = jax.block_until_ready(
        gla_attention(q4, k4, v4, g4, chunk_size=CHUNK, sub_chunk=SUB))
    want = jax.block_until_ready(gla_reference(q4, k4, v4, g4))
    check(got, want, "gla_lane_dense")

    # Small-head fallback layout + sequence padding (N=24 padded to 32).
    B2, N2, E2, H2 = 2, 24, 32, 4
    x2 = jax.random.normal(jax.random.PRNGKey(1), (B2, N2, E2), jnp.float32)
    p2 = init_params(jax.random.PRNGKey(2), E2, H2)
    q2, k2, v2, g2 = compute_qkv_decay(x2, p2, H2)
    got2 = jax.block_until_ready(
        gla_attention(q2, k2, v2, g2, chunk_size=16, sub_chunk=8))
    want2 = jax.block_until_ready(gla_reference(q2, k2, v2, g2))
    check(got2, want2, "gla_fallback_padded")

    print("KERNEL_OK")
</pallas_src>

<mosaic_0001>
module attributes {stable_mosaic.version = 11 : i64} {
  func.func @_linear_kernel(%arg0: i32, %arg1: i32, %arg2: i32, %arg3: memref<64x256xf32, #tpu.memory_space<vmem>>, %arg4: memref<256x256xf32, #tpu.memory_space<vmem>>, %arg5: memref<64x256xf32, #tpu.memory_space<vmem>>, %arg6: memref<64x256xf32, #tpu.memory_space<vmem>>) attributes {dimension_semantics = [#tpu.dimension_semantics<parallel>, #tpu.dimension_semantics<parallel>, #tpu.dimension_semantics<arbitrary>], iteration_bounds = array<i64: 1, 1, 1>, scalar_prefetch = 0 : i64, scratch_operands = 1 : i64, tpu.core_type = #tpu.core_type<tc>, window_params = [{transform_indices = @transform_0, window_bounds = array<i64: 64, 256>}, {transform_indices = @transform_1, window_bounds = array<i64: 256, 256>}, {transform_indices = @transform_2, window_bounds = array<i64: 64, 256>}]} {
    %c0_i32 = arith.constant 0 : i32
    %0 = arith.cmpi eq, %arg2, %c0_i32 : i32
    %1 = arith.extui %0 : i1 to i32
    %c0_i32_0 = arith.constant 0 : i32
    %2 = arith.cmpi ne, %1, %c0_i32_0 : i32
    scf.if %2 {
      %cst_10 = arith.constant 0.000000e+00 : f32
      %14 = vector.broadcast %cst_10 : f32 to vector<64x256xf32>
      %c0_11 = arith.constant 0 : index
      %c0_12 = arith.constant 0 : index
      %15 = vector.load %arg6[%c0_11, %c0_12] : memref<64x256xf32, #tpu.memory_space<vmem>>, vector<64x256xf32>
      tpu.vector_store %arg6[%c0_11, %c0_12], %14 {strides = array<i32>} : memref<64x256xf32, #tpu.memory_space<vmem>>, vector<64x256xf32>,
    } else {
    }
    %c0 = arith.constant 0 : index
    %c0_1 = arith.constant 0 : index
    %3 = vector.load %arg6[%c0, %c0_1] : memref<64x256xf32, #tpu.memory_space<vmem>>, vector<64x256xf32>
    %c0_2 = arith.constant 0 : index
    %c0_3 = arith.constant 0 : index
    %4 = vector.load %arg3[%c0_2, %c0_3] : memref<64x256xf32, #tpu.memory_space<vmem>>, vector<64x256xf32>
    %5 = arith.truncf %4 : vector<64x256xf32> to vector<64x256xbf16>
    %c0_4 = arith.constant 0 : index
    %c0_5 = arith.constant 0 : index
    %6 = vector.load %arg4[%c0_4, %c0_5] : memref<256x256xf32, #tpu.memory_space<vmem>>, vector<256x256xf32>
    %7 = arith.truncf %6 : vector<256x256xf32> to vector<256x256xbf16>
    %cst = arith.constant dense<0.000000e+00> : vector<64x256xf32>
    %8 = tpu.matmul %5, %7, %cst {dimension_numbers = #tpu.dot_dimension_numbers<[1], [1], [0], [0], [0, 0, 1, 0], [], []>} : vector<64x256xbf16>, vector<256x256xbf16>, vector<64x256xf32> -> vector<64x256xf32>
    %9 = arith.addf %3, %8 : vector<64x256xf32>
    %c0_6 = arith.constant 0 : index
    %c0_7 = arith.constant 0 : index
    %10 = vector.load %arg6[%c0_6, %c0_7] : memref<64x256xf32, #tpu.memory_space<vmem>>, vector<64x256xf32>
    tpu.vector_store %arg6[%c0_6, %c0_7], %9 {strides = array<i32>} : memref<64x256xf32, #tpu.memory_space<vmem>>, vector<64x256xf32>,
    %c0_i32_8 = arith.constant 0 : i32
    %11 = arith.cmpi eq, %arg2, %c0_i32_8 : i32
    %12 = arith.extui %11 : i1 to i32
    %c0_i32_9 = arith.constant 0 : i32
    %13 = arith.cmpi ne, %12, %c0_i32_9 : i32
    scf.if %13 {
      %c0_10 = arith.constant 0 : index
      %c0_11 = arith.constant 0 : index
      %14 = vector.load %arg6[%c0_10, %c0_11] : memref<64x256xf32, #tpu.memory_space<vmem>>, vector<64x256xf32>
      %cst_12 = arith.constant 0.000000e+00 : f32
      %15 = vector.broadcast %cst_12 : f32 to vector<64x256xf32>
      %16 = arith.subf %15, %14 : vector<64x256xf32>
      %17 = math.exp %16 : vector<64x256xf32>
      %cst_13 = arith.constant 1.000000e+00 : f32
      %18 = vector.broadcast %cst_13 : f32 to vector<64x256xf32>
      %19 = arith.addf %18, %17 : vector<64x256xf32>
      %cst_14 = arith.constant 1.000000e+00 : f32
      %20 = vector.broadcast %cst_14 : f32 to vector<64x256xf32>
      %21 = arith.divf %20, %19 : vector<64x256xf32>
      %22 = arith.mulf %14, %21 : vector<64x256xf32>
      %c0_15 = arith.constant 0 : index
      %c0_16 = arith.constant 0 : index
      %23 = vector.load %arg5[%c0_15, %c0_16] : memref<64x256xf32, #tpu.memory_space<vmem>>, vector<64x256xf32>
      tpu.vector_store %arg5[%c0_15, %c0_16], %22 {strides = array<i32>} : memref<64x256xf32, #tpu.memory_space<vmem>>, vector<64x256xf32>,
    } else {
    }
    return
  }
  func.func @transform_0(%arg0: i32, %arg1: i32, %arg2: i32) -> (i32, i32) {
    %c0_i32 = arith.constant 0 : i32
    return %arg0, %arg2 : i32, i32
  }
  func.func @transform_1(%arg0: i32, %arg1: i32, %arg2: i32) -> (i32, i32) {
    %c0_i32 = arith.constant 0 : i32
    return %arg1, %arg2 : i32, i32
  }
  func.func @transform_2(%arg0: i32, %arg1: i32, %arg2: i32) -> (i32, i32) {
    %c0_i32 = arith.constant 0 : i32
    return %arg0, %arg1 : i32, i32
  }
}

</mosaic_0001>

<llo_original>
// kernel: tpu_custom_call.1
$region0: #{tpu_custom_call.1}
  #allocation0 [shape = 'u32[]', space=smem, size = 0x4, offset = 0x4, fixed_abs, tag = 'smem constant byte address 0x4 - core index']
  #allocation1 [shape = 'u32[144,128]{1,0:T(1,128)}', space=vmem, size = 0x12000, scoped, tag = 'internal scratch']
  #allocation2 [shape = 'f32[64,256]{1,0:T(8,128)}', space=vmem, size = 0x10000, scoped, tag = 'scratch operand']
  %s0 = inlined_call_operand.hbm [shape: f32[64,256], index: 0, kind: input, shape index: {}]
  %s1 = inlined_call_operand.hbm [shape: f32[256,256], index: 1, kind: input, shape index: {}]
  %s2 = inlined_call_operand.hbm [shape: f32[64,256], index: 2, kind: output, shape index: {}]
  %s3 = sld [smem:[#allocation0]]
  $region34: #{tpu_custom_call.1} parent=0
    _
  %s5 = ssub.s32 1, %s3
  %s6 = scalar_select 0, %s5, %s3
  $region1: #{tpu_custom_call.1} parent=0
    #allocation3 [shape = 'u8[65536]{0}', space=vmem, size = 0x10000, scoped, tag = 'input window, operand 0, single buffered']
    #allocation4 [shape = 's32[1]{0}', space=sflag, size = 0x4, scoped, tag = 'scoped memory for tpu_custom_call.1']
    #allocation5 [shape = 's32[1]{0}', space=sflag, size = 0x4, scoped, tag = 'scoped memory for tpu_custom_call.1']
    #allocation6 [shape = 'u8[262144]{0}', space=vmem, size = 0x40000, scoped, tag = 'input window, operand 1, single buffered']
    #allocation7 [shape = 's32[1]{0}', space=sflag, size = 0x4, scoped, tag = 'scoped memory for tpu_custom_call.1']
    #allocation8 [shape = 'u8[65536]{0}', space=vmem, size = 0x10000, scoped, tag = 'output window, operand 0, single buffered']
    %7 = vsyncpa [#allocation4], 0
    %8 = vsyncpa [#allocation7], 0
    %9 = vsyncpa [#allocation5], 0
    // Predicated region
    $region2: #{tpu_custom_call.1} parent=1 // pred_check
      _
    $region3: #{tpu_custom_call.1} parent=1 // pred_check_branch
      %11 = sbr.rel (0) target = $region5
    $region4: #{tpu_custom_call.1} parent=1 // pred_region
      %s13 = ssub.s32 2048, 2048
      %14 = vsyncadd [#allocation4], %s13
      %s15 = sshll.u32 [#allocation3], 4
      %s16 = int_to_ptr.vmem [resolvable:$true] %s15
      %21 = dma.hbm_to_vmem [thread:$0]  %s0, 2048, %s16, [#allocation4], 256, 256, 16
    $region5: #{tpu_custom_call.1} parent=1 // pred_fallthru
      _
    // Predicated region
    $region6: #{tpu_custom_call.1} parent=1 // pred_check
      _
    $region7: #{tpu_custom_call.1} parent=1 // pred_check_branch
      %23 = sbr.rel (0) target = $region9
    $region8: #{tpu_custom_call.1} parent=1 // pred_region
      %s25 = ssub.s32 8192, 8192
      %26 = vsyncadd [#allocation7], %s25
      %s27 = sshll.u32 [#allocation6], 4
      %s28 = int_to_ptr.vmem [resolvable:$true] %s27
      %33 = dma.hbm_to_vmem [thread:$0]  %s1, 8192, %s28, [#allocation7], 256, 256, 16
    $region9: #{tpu_custom_call.1} parent=1 // pred_fallthru
      _
    // Predicated region
    $region10: #{tpu_custom_call.1} parent=1 // pred_check
      _
    $region11: #{tpu_custom_call.1} parent=1 // pred_check_branch
      %35 = sbr.rel (0) target = $region13
    $region12: #{tpu_custom_call.1} parent=1 // pred_region
      %36 = dma.done [#allocation4], 2048
    $region13: #{tpu_custom_call.1} parent=1 // pred_fallthru
      _
    // Predicated region
    $region14: #{tpu_custom_call.1} parent=1 // pred_check
      _
    $region15: #{tpu_custom_call.1} parent=1 // pred_check_branch
      %38 = sbr.rel (0) target = $region17
    $region16: #{tpu_custom_call.1} parent=1 // pred_region
      %39 = dma.done [#allocation7], 8192
    $region17: #{tpu_custom_call.1} parent=1 // pred_fallthru
      _
    %p40 = scmp.eq.s32.totalorder 0, 0
    // Predicated region
    $region18: #{tpu_custom_call.1} parent=1 // pred_check
      %p41 = pneg %p40
    $region19: #{tpu_custom_call.1} parent=1 // pred_check_branch
      %43 = sbr.rel (%p41) target = $region21
    $region20: #{tpu_custom_call.1} parent=1 // pred_region
      %44 = vst [vmem:[#allocation2] sm:$0xff] 0.0
      %45 = vst [vmem:[#allocation2 + $0x8] sm:$0xff] 0.0
      %46 = vst [vmem:[#allocation2 + $0x10] sm:$0xff] 0.0
      %47 = vst [vmem:[#allocation2 + $0x18] sm:$0xff] 0.0
      %48 = vst [vmem:[#allocation2 + $0x20] sm:$0xff] 0.0
      %49 = vst [vmem:[#allocation2 + $0x28] sm:$0xff] 0.0
      %50 = vst [vmem:[#allocation2 + $0x30] sm:$0xff] 0.0
      %51 = vst [vmem:[#allocation2 + $0x38] sm:$0xff] 0.0
      %52 = vst [vmem:[#allocation2 + $0x40] sm:$0xff] 0.0
      %53 = vst [vmem:[#allocation2 + $0x48] sm:$0xff] 0.0
      %54 = vst [vmem:[#allocation2 + $0x50] sm:$0xff] 0.0
      %55 = vst [vmem:[#allocation2 + $0x58] sm:$0xff] 0.0
      %56 = vst [vmem:[#allocation2 + $0x60] sm:$0xff] 0.0
      %57 = vst [vmem:[#allocation2 + $0x68] sm:$0xff] 0.0
      %58 = vst [vmem:[#allocation2 + $0x70] sm:$0xff] 0.0
      %59 = vst [vmem:[#allocation2 + $0x78] sm:$0xff] 0.0
    $region21: #{tpu_custom_call.1} parent=1 // pred_fallthru
      _
    %v60 = vld [vmem:[#allocation2] sm:$0xff]
    %v61 = vld [vmem:[#allocation2 + $0x8] sm:$0xff]
    %v62 = vld [vmem:[#allocation2 + $0x10] sm:$0xff]
    %v63 = vld [vmem:[#allocation2 + $0x18] sm:$0xff]
    %v64 = vld [vmem:[#allocation2 + $0x20] sm:$0xff]
    %v65 = vld [vmem:[#allocation2 + $0x28] sm:$0xff]
    %v66 = vld [vmem:[#allocation2 + $0x30] sm:$0xff]
    %v67 = vld [vmem:[#allocation2 + $0x38] sm:$0xff]
    %v68 = vld [vmem:[#allocation2 + $0x40] sm:$0xff]
    %v69 = vld [vmem:[#allocation2 + $0x48] sm:$0xff]
    %v70 = vld [vmem:[#allocation2 + $0x50] sm:$0xff]
    %v71 = vld [vmem:[#allocation2 + $0x58] sm:$0xff]
    %v72 = vld [vmem:[#allocation2 + $0x60] sm:$0xff]
    %v73 = vld [vmem:[#allocation2 + $0x68] sm:$0xff]
    %v74 = vld [vmem:[#allocation2 + $0x70] sm:$0xff]
    %v75 = vld [vmem:[#allocation2 + $0x78] sm:$0xff]
    %v76 = vld [vmem:[#allocation3] sm:$0xff]
    %v77 = vld [vmem:[#allocation3 + $0x8] sm:$0xff]
    %v78 = vld [vmem:[#allocation3 + $0x10] sm:$0xff]
    %v79 = vld [vmem:[#allocation3 + $0x18] sm:$0xff]
    %v80 = vld [vmem:[#allocation3 + $0x20] sm:$0xff]
    %v81 = vld [vmem:[#allocation3 + $0x28] sm:$0xff]
    %v82 = vld [vmem:[#allocation3 + $0x30] sm:$0xff]
    %v83 = vld [vmem:[#allocation3 + $0x38] sm:$0xff]
    %v84 = vld [vmem:[#allocation3 + $0x40] sm:$0xff]
    %v85 = vld [vmem:[#allocation3 + $0x48] sm:$0xff]
    %v86 = vld [vmem:[#allocation3 + $0x50] sm:$0xff]
    %v87 = vld [vmem:[#allocation3 + $0x58] sm:$0xff]
    %v88 = vld [vmem:[#allocation3 + $0x60] sm:$0xff]
    %v89 = vld [vmem:[#allocation3 + $0x68] sm:$0xff]
    %v90 = vld [vmem:[#allocation3 + $0x70] sm:$0xff]
    %v91 = vld [vmem:[#allocation3 + $0x78] sm:$0xff]
    %v92 = vpack.c.bf16 %v78, %v76
    %v93 = vpack.c.bf16 %v79, %v77
    %v94 = vpack.c.bf16 %v82, %v80
    %v95 = vpack.c.bf16 %v83, %v81
    %v96 = vpack.c.bf16 %v86, %v84
    %v97 = vpack.c.bf16 %v87, %v85
    %v98 = vpack.c.bf16 %v90, %v88
    %v99 = vpack.c.bf16 %v91, %v89
    %v100 = vld [vmem:[#allocation6] sm:$0xff]
    %v101 = vld [vmem:[#allocation6 + $0x8] sm:$0xff]
    %v102 = vld [vmem:[#allocation6 + $0x10] sm:$0xff]
    %v103 = vld [vmem:[#allocation6 + $0x18] sm:$0xff]
    %v104 = vld [vmem:[#allocation6 + $0x20] sm:$0xff]
    %v105 = vld [vmem:[#allocation6 + $0x28] sm:$0xff]
    %v106 = vld [vmem:[#allocation6 + $0x30] sm:$0xff]
    %v107 = vld [vmem:[#allocation6 + $0x38] sm:$0xff]
    %v108 = vld [vmem:[#allocation6 + $0x40] sm:$0xff]
    %v109 = vld [vmem:[#allocation6 + $0x48] sm:$0xff]
    %v110 = vld [vmem:[#allocation6 + $0x50] sm:$0xff]
    %v111 = vld [vmem:[#allocation6 + $0x58] sm:$0xff]
    %v112 = vld [vmem:[#allocation6 + $0x60] sm:$0xff]
    %v113 = vld [vmem:[#allocation6 + $0x68] sm:$0xff]
    %v114 = vld [vmem:[#allocation6 + $0x70] sm:$0xff]
    %v115 = vld [vmem:[#allocation6 + $0x78] sm:$0xff]
    %v116 = vld [vmem:[#allocation6 + $0x80] sm:$0xff]
    %v117 = vld [vmem:[#allocation6 + $0x88] sm:$0xff]
    %v118 = vld [vmem:[#allocation6 + $0x90] sm:$0xff]
    %v119 = vld [vmem:[#allocation6 + $0x98] sm:$0xff]
    %v120 = vld [vmem:[#allocation6 + $0xa0] sm:$0xff]
    %v121 = vld [vmem:[#allocation6 + $0xa8] sm:$0xff]
    %v122 = vld [vmem:[#allocation6 + $0xb0] sm:$0xff]
    %v123 = vld [vmem:[#allocation6 + $0xb8] sm:$0xff]
    %v124 = vld [vmem:[#allocation6 + $0xc0] sm:$0xff]
    %v125 = vld [vmem:[#allocation6 + $0xc8] sm:$0xff]
    %v126 = vld [vmem:[#allocation6 + $0xd0] sm:$0xff]
    %v127 = vld [vmem:[#allocation6 + $0xd8] sm:$0xff]
    %v128 = vld [vmem:[#allocation6 + $0xe0] sm:$0xff]
    %v129 = vld [vmem:[#allocation6 + $0xe8] sm:$0xff]
    %v130 = vld [vmem:[#allocation6 + $0xf0] sm:$0xff]
    %v131 = vld [vmem:[#allocation6 + $0xf8] sm:$0xff]
    %v132 = vld [vmem:[#allocation6 + $0x100] sm:$0xff]
    %v133 = vld [vmem:[#allocation6 + $0x108] sm:$0xff]
    %v134 = vld [vmem:[#allocation6 + $0x110] sm:$0xff]
    %v135 = vld [vmem:[#allocation6 + $0x118] sm:$0xff]
    %v136 = vld [vmem:[#allocation6 + $0x120] sm:$0xff]
    %v137 = vld [vmem:[#allocation6 + $0x128] sm:$0xff]
    %v138 = vld [vmem:[#allocation6 + $0x130] sm:$0xff]
    %v139 = vld [vmem:[#allocation6 + $0x138] sm:$0xff]
    %v140 = vld [vmem:[#allocation6 + $0x140] sm:$0xff]
    %v141 = vld [vmem:[#allocation6 + $0x148] sm:$0xff]
    %v142 = vld [vmem:[#allocation6 + $0x150] sm:$0xff]
    %v143 = vld [vmem:[#allocation6 + $0x158] sm:$0xff]
    %v144 = vld [vmem:[#allocation6 + $0x160] sm:$0xff]
    %v145 = vld [vmem:[#allocation6 + $0x168] sm:$0xff]
    %v146 = vld [vmem:[#allocation6 + $0x170] sm:$0xff]
    %v147 = vld [vmem:[#allocation6 + $0x178] sm:$0xff]
    %v148 = vld [vmem:[#allocation6 + $0x180] sm:$0xff]
    %v149 = vld [vmem:[#allocation6 + $0x188] sm:$0xff]
    %v150 = vld [vmem:[#allocation6 + $0x190] sm:$0xff]
    %v151 = vld [vmem:[#allocation6 + $0x198] sm:$0xff]
    %v152 = vld [vmem:[#allocation6 + $0x1a0] sm:$0xff]
    %v153 = vld [vmem:[#allocation6 + $0x1a8] sm:$0xff]
    %v154 = vld [vmem:[#allocation6 + $0x1b0] sm:$0xff]
    %v155 = vld [vmem:[#allocation6 + $0x1b8] sm:$0xff]
    %v156 = vld [vmem:[#allocation6 + $0x1c0] sm:$0xff]
    %v157 = vld [vmem:[#allocation6 + $0x1c8] sm:$0xff]
    %v158 = vld [vmem:[#allocation6 + $0x1d0] sm:$0xff]
    %v159 = vld [vmem:[#allocation6 + $0x1d8] sm:$0xff]
    %v160 = vld [vmem:[#allocation6 + $0x1e0] sm:$0xff]
    %v161 = vld [vmem:[#allocation6 + $0x1e8] sm:$0xff]
    %v162 = vld [vmem:[#allocation6 + $0x1f0] sm:$0xff]
    %v163 = vld [vmem:[#allocation6 + $0x1f8] sm:$0xff]
    %v164 = vpack.c.bf16 %v102, %v100
    %v165 = vpack.c.bf16 %v103, %v101
    %v166 = vpack.c.bf16 %v106, %v104
    %v167 = vpack.c.bf16 %v107, %v105
    %v168 = vpack.c.bf16 %v110, %v108
    %v169 = vpack.c.bf16 %v111, %v109
    %v170 = vpack.c.bf16 %v114, %v112
    %v171 = vpack.c.bf16 %v115, %v113
    %v172 = vpack.c.bf16 %v118, %v116
    %v173 = vpack.c.bf16 %v119, %v117
    %v174 = vpack.c.bf16 %v122, %v120
    %v175 = vpack.c.bf16 %v123, %v121
    %v176 = vpack.c.bf16 %v126, %v124
    %v177 = vpack.c.bf16 %v127, %v125
    %v178 = vpack.c.bf16 %v130, %v128
    %v179 = vpack.c.bf16 %v131, %v129
    %v180 = vpack.c.bf16 %v134, %v132
    %v181 = vpack.c.bf16 %v135, %v133
    %v182 = vpack.c.bf16 %v138, %v136
    %v183 = vpack.c.bf16 %v139, %v137
    %v184 = vpack.c.bf16 %v142, %v140
    %v185 = vpack.c.bf16 %v143, %v141
    %v186 = vpack.c.bf16 %v146, %v144
    %v187 = vpack.c.bf16 %v147, %v145
    %v188 = vpack.c.bf16 %v150, %v148
    %v189 = vpack.c.bf16 %v151, %v149
    %v190 = vpack.c.bf16 %v154, %v152
    %v191 = vpack.c.bf16 %v155, %v153
    %v192 = vpack.c.bf16 %v158, %v156
    %v193 = vpack.c.bf16 %v159, %v157
    %v194 = vpack.c.bf16 %v162, %v160
    %v195 = vpack.c.bf16 %v163, %v161
    %196 = vmatprep.subr.bf16.mxu0 %v179
    %197 = vmatpush1.bf16.xpose.msra.mxu0 %v178
    %198 = vmatprep.subr.bf16.mxu0 %v177
    %199 = vmatpush1.bf16.xpose.msra.mxu0 %v176
    %200 = vmatprep.subr.bf16.mxu0 %v175
    %201 = vmatpush1.bf16.xpose.msra.mxu0 %v174
    %202 = vmatprep.subr.bf16.mxu0 %v173
    %203 = vmatpush1.bf16.xpose.msra.mxu0 %v172
    %204 = vmatprep.subr.bf16.mxu0 %v171
    %205 = vmatpush1.bf16.xpose.msra.mxu0 %v170
    %206 = vmatprep.subr.bf16.mxu0 %v169
    %207 = vmatpush1.bf16.xpose.msra.mxu0 %v168
    %208 = vmatprep.subr.bf16.mxu0 %v167
    %209 = vmatpush1.bf16.xpose.msra.mxu0 %v166
    %210 = vmatprep.subr.bf16.mxu0 %v165
    %211 = vmatpush1.bf16.xpose.msra.mxu0 %v164
    %212 = vmatprep.subr.bf16.mxu0 %v195
    %213 = vmatpush2.bf16.xpose.msra.mxu0 %v194
    %214 = vmatprep.subr.bf16.mxu0 %v193
    %215 = vmatpush2.bf16.xpose.msra.mxu0 %v192
    %216 = vmatprep.subr.bf16.mxu0 %v191
    %217 = vmatpush2.bf16.xpose.msra.mxu0 %v190
    %218 = vmatprep.subr.bf16.mxu0 %v189
    %219 = vmatpush2.bf16.xpose.msra.mxu0 %v188
    %220 = vmatprep.subr.bf16.mxu0 %v187
    %221 = vmatpush2.bf16.xpose.msra.mxu0 %v186
    %222 = vmatprep.subr.bf16.mxu0 %v185
    %223 = vmatpush2.bf16.xpose.msra.mxu0 %v184
    %224 = vmatprep.subr.bf16.mxu0 %v183
    %225 = vmatpush2.bf16.xpose.msra.mxu0 %v182
    %226 = vmatprep.subr.bf16.mxu0 %v181
    %227 = vmatpush2.bf16.xpose.msra.mxu0 %v180
    %228 = vmatprep.mubr.bf16.mxu0 %v93
    %229 = vmatmul.mubr.bf16.gmra.mxu0 %v92
    %v230 = vpop.f32.mrf.mxu0
    %v231 = vadd.f32 0.0, %v230
    %v232 = vpop.f32.mrf.mxu0
    %v233 = vadd.f32 0.0, %v232
    %v234 = vpop.f32.mrf.mxu0
    %v235 = vadd.f32 0.0, %v234
    %v236 = vpop.f32.mrf.mxu0
    %v237 = vadd.f32 0.0, %v236
    %238 = vmatprep.mubr.bf16.mxu0 %v95
    %239 = vmatmul.mubr.bf16.gmra.mxu0 %v94
    %v240 = vpop.f32.mrf.mxu0
    %v241 = vadd.f32 0.0, %v240
    %v242 = vpop.f32.mrf.mxu0
    %v243 = vadd.f32 0.0, %v242
    %v244 = vpop.f32.mrf.mxu0
    %v245 = vadd.f32 0.0, %v244
    %v246 = vpop.f32.mrf.mxu0
    %v247 = vadd.f32 0.0, %v246
    %248 = vmatprep.mubr.bf16.mxu0 %v97
    %249 = vmatmul.mubr.bf16.gmra.mxu0 %v96
    %v250 = vpop.f32.mrf.mxu0
    %v251 = vadd.f32 0.0, %v250
    %v252 = vpop.f32.mrf.mxu0
    %v253 = vadd.f32 0.0, %v252
    %v254 = vpop.f32.mrf.mxu0
    %v255 = vadd.f32 0.0, %v254
    %v256 = vpop.f32.mrf.mxu0
    %v257 = vadd.f32 0.0, %v256
    %258 = vmatprep.mubr.bf16.mxu0 %v99
    %259 = vmatmul.mubr.bf16.gmra.mxu0 %v98
    %v260 = vpop.f32.mrf.mxu0
    %v261 = vadd.f32 0.0, %v260
    %v262 = vpop.f32.mrf.mxu0
    %v263 = vadd.f32 0.0, %v262
    %v264 = vpop.f32.mrf.mxu0
    %v265 = vadd.f32 0.0, %v264
    %v266 = vpop.f32.mrf.mxu0
    %v267 = vadd.f32 0.0, %v266
    %268 = vdwg.mxu0
    %v269 = vadd.f32 %v60, %v231
    %v270 = vadd.f32 %v61, %v233
    %v271 = vadd.f32 %v62, %v235
    %v272 = vadd.f32 %v63, %v237
    %v273 = vadd.f32 %v64, %v241
    %v274 = vadd.f32 %v65, %v243
    %v275 = vadd.f32 %v66, %v245
    %v276 = vadd.f32 %v67, %v247
    %v277 = vadd.f32 %v68, %v251
    %v278 = vadd.f32 %v69, %v253
    %v279 = vadd.f32 %v70, %v255
    %v280 = vadd.f32 %v71, %v257
    %v281 = vadd.f32 %v72, %v261
    %v282 = vadd.f32 %v73, %v263
    %v283 = vadd.f32 %v74, %v265
    %v284 = vadd.f32 %v75, %v267
    %285 = vst [vmem:[#allocation2] sm:$0xff] %v269
    %286 = vst [vmem:[#allocation2 + $0x8] sm:$0xff] %v270
    %287 = vst [vmem:[#allocation2 + $0x10] sm:$0xff] %v271
    %288 = vst [vmem:[#allocation2 + $0x18] sm:$0xff] %v272
    %289 = vst [vmem:[#allocation2 + $0x20] sm:$0xff] %v273
    %290 = vst [vmem:[#allocation2 + $0x28] sm:$0xff] %v274
    %291 = vst [vmem:[#allocation2 + $0x30] sm:$0xff] %v275
    %292 = vst [vmem:[#allocation2 + $0x38] sm:$0xff] %v276
    %293 = vst [vmem:[#allocation2 + $0x40] sm:$0xff] %v277
    %294 = vst [vmem:[#allocation2 + $0x48] sm:$0xff] %v278
    %295 = vst [vmem:[#allocation2 + $0x50] sm:$0xff] %v279
    %296 = vst [vmem:[#allocation2 + $0x58] sm:$0xff] %v280
    %297 = vst [vmem:[#allocation2 + $0x60] sm:$0xff] %v281
    %298 = vst [vmem:[#allocation2 + $0x68] sm:$0xff] %v282
    %299 = vst [vmem:[#allocation2 + $0x70] sm:$0xff] %v283
    %300 = vst [vmem:[#allocation2 + $0x78] sm:$0xff] %v284
    // Predicated region
    $region22: #{tpu_custom_call.1} parent=1 // pred_check
      %p301 = pneg %p40
    $region23: #{tpu_custom_call.1} parent=1 // pred_check_branch
      %303 = sbr.rel (%p301) target = $region25
    $region24: #{tpu_custom_call.1} parent=1 // pred_region
      %v304 = vld [vmem:[#allocation2] sm:$0xff]
      %v305 = vld [vmem:[#allocation2 + $0x8] sm:$0xff]
      %v306 = vld [vmem:[#allocation2 + $0x10] sm:$0xff]
      %v307 = vld [vmem:[#allocation2 + $0x18] sm:$0xff]
      %v308 = vld [vmem:[#allocation2 + $0x20] sm:$0xff]
      %v309 = vld [vmem:[#allocation2 + $0x28] sm:$0xff]
      %v310 = vld [vmem:[#allocation2 + $0x30] sm:$0xff]
      %v311 = vld [vmem:[#allocation2 + $0x38] sm:$0xff]
      %v312 = vld [vmem:[#allocation2 + $0x40] sm:$0xff]
      %v313 = vld [vmem:[#allocation2 + $0x48] sm:$0xff]
      %v314 = vld [vmem:[#allocation2 + $0x50] sm:$0xff]
      %v315 = vld [vmem:[#allocation2 + $0x58] sm:$0xff]
      %v316 = vld [vmem:[#allocation2 + $0x60] sm:$0xff]
      %v317 = vld [vmem:[#allocation2 + $0x68] sm:$0xff]
      %v318 = vld [vmem:[#allocation2 + $0x70] sm:$0xff]
      %v319 = vld [vmem:[#allocation2 + $0x78] sm:$0xff]
      %v320 = vsub.f32 0.0, %v304
      %v321 = vsub.f32 0.0, %v305
      %v322 = vsub.f32 0.0, %v306
      %v323 = vsub.f32 0.0, %v307
      %v324 = vsub.f32 0.0, %v308
      %v325 = vsub.f32 0.0, %v309
      %v326 = vsub.f32 0.0, %v310
      %v327 = vsub.f32 0.0, %v311
      %v328 = vsub.f32 0.0, %v312
      %v329 = vsub.f32 0.0, %v313
      %v330 = vsub.f32 0.0, %v314
      %v331 = vsub.f32 0.0, %v315
      %v332 = vsub.f32 0.0, %v316
      %v333 = vsub.f32 0.0, %v317
      %v334 = vsub.f32 0.0, %v318
      %v335 = vsub.f32 0.0, %v319
      %v336 = vmul.f32 %v320, 1.442695
      %v337 = vpow.pop %v336
      %v338 = vmul.f32 %v321, 1.442695
      %v339 = vpow.pop %v338
      %v340 = vmul.f32 %v322, 1.442695
      %v341 = vpow.pop %v340
      %v342 = vmul.f32 %v323, 1.442695
      %v343 = vpow.pop %v342
      %v344 = vmul.f32 %v324, 1.442695
      %v345 = vpow.pop %v344
      %v346 = vmul.f32 %v325, 1.442695
      %v347 = vpow.pop %v346
      %v348 = vmul.f32 %v326, 1.442695
      %v349 = vpow.pop %v348
      %v350 = vmul.f32 %v327, 1.442695
      %v351 = vpow.pop %v350
      %v352 = vmul.f32 %v328, 1.442695
      %v353 = vpow.pop %v352
      %v354 = vmul.f32 %v329, 1.442695
      %v355 = vpow.pop %v354
      %v356 = vmul.f32 %v330, 1.442695
      %v357 = vpow.pop %v356
      %v358 = vmul.f32 %v331, 1.442695
      %v359 = vpow.pop %v358
      %v360 = vmul.f32 %v332, 1.442695
      %v361 = vpow.pop %v360
      %v362 = vmul.f32 %v333, 1.442695
      %v363 = vpow.pop %v362
      %v364 = vmul.f32 %v334, 1.442695
      %v365 = vpow.pop %v364
      %v366 = vmul.f32 %v335, 1.442695
      %v367 = vpow.pop %v366
      %v368 = vadd.f32 %v337, 1.0
      %v369 = vadd.f32 %v339, 1.0
      %v370 = vadd.f32 %v341, 1.0
      %v371 = vadd.f32 %v343, 1.0
      %v372 = vadd.f32 %v345, 1.0
      %v373 = vadd.f32 %v347, 1.0
      %v374 = vadd.f32 %v349, 1.0
      %v375 = vadd.f32 %v351, 1.0
      %v376 = vadd.f32 %v353, 1.0
      %v377 = vadd.f32 %v355, 1.0
      %v378 = vadd.f32 %v357, 1.0
      %v379 = vadd.f32 %v359, 1.0
      %v380 = vadd.f32 %v361, 1.0
      %v381 = vadd.f32 %v363, 1.0
      %v382 = vadd.f32 %v365, 1.0
      %v383 = vadd.f32 %v367, 1.0
      %v384 = vrcp.pop %v368
      %v385 = vmul.f32 1.0, %v384
      %v386 = vrcp.pop %v369
      %v387 = vmul.f32 1.0, %v386
      %v388 = vrcp.pop %v370
      %v389 = vmul.f32 1.0, %v388
      %v390 = vrcp.pop %v371
      %v391 = vmul.f32 1.0, %v390
      %v392 = vrcp.pop %v372
      %v393 = vmul.f32 1.0, %v392
      %v394 = vrcp.pop %v373
      %v395 = vmul.f32 1.0, %v394
      %v396 = vrcp.pop %v374
      %v397 = vmul.f32 1.0, %v396
      %v398 = vrcp.pop %v375
      %v399 = vmul.f32 1.0, %v398
      %v400 = vrcp.pop %v376
      %v401 = vmul.f32 1.0, %v400
      %v402 = vrcp.pop %v377
      %v403 = vmul.f32 1.0, %v402
      %v404 = vrcp.pop %v378
      %v405 = vmul.f32 1.0, %v404
      %v406 = vrcp.pop %v379
      %v407 = vmul.f32 1.0, %v406
      %v408 = vrcp.pop %v380
      %v409 = vmul.f32 1.0, %v408
      %v410 = vrcp.pop %v381
      %v411 = vmul.f32 1.0, %v410
      %v412 = vrcp.pop %v382
      %v413 = vmul.f32 1.0, %v412
      %v414 = vrcp.pop %v383
      %v415 = vmul.f32 1.0, %v414
      %v416 = vmul.f32 %v304, %v385
      %v417 = vmul.f32 %v305, %v387
      %v418 = vmul.f32 %v306, %v389
      %v419 = vmul.f32 %v307, %v391
      %v420 = vmul.f32 %v308, %v393
      %v421 = vmul.f32 %v309, %v395
      %v422 = vmul.f32 %v310, %v397
      %v423 = vmul.f32 %v311, %v399
      %v424 = vmul.f32 %v312, %v401
      %v425 = vmul.f32 %v313, %v403
      %v426 = vmul.f32 %v314, %v405
      %v427 = vmul.f32 %v315, %v407
      %v428 = vmul.f32 %v316, %v409
      %v429 = vmul.f32 %v317, %v411
      %v430 = vmul.f32 %v318, %v413
      %v431 = vmul.f32 %v319, %v415
      %432 = vst [vmem:[#allocation8] sm:$0xff] %v416
      %433 = vst [vmem:[#allocation8 + $0x8] sm:$0xff] %v417
      %434 = vst [vmem:[#allocation8 + $0x10] sm:$0xff] %v418
      %435 = vst [vmem:[#allocation8 + $0x18] sm:$0xff] %v419
      %436 = vst [vmem:[#allocation8 + $0x20] sm:$0xff] %v420
      %437 = vst [vmem:[#allocation8 + $0x28] sm:$0xff] %v421
      %438 = vst [vmem:[#allocation8 + $0x30] sm:$0xff] %v422
      %439 = vst [vmem:[#allocation8 + $0x38] sm:$0xff] %v423
      %440 = vst [vmem:[#allocation8 + $0x40] sm:$0xff] %v424
      %441 = vst [vmem:[#allocation8 + $0x48] sm:$0xff] %v425
      %442 = vst [vmem:[#allocation8 + $0x50] sm:$0xff] %v426
      %443 = vst [vmem:[#allocation8 + $0x58] sm:$0xff] %v427
      %444 = vst [vmem:[#allocation8 + $0x60] sm:$0xff] %v428
      %445 = vst [vmem:[#allocation8 + $0x68] sm:$0xff] %v429
      %446 = vst [vmem:[#allocation8 + $0x70] sm:$0xff] %v430
      %447 = vst [vmem:[#allocation8 + $0x78] sm:$0xff] %v431
    $region25: #{tpu_custom_call.1} parent=1 // pred_fallthru
      _
    // Predicated region
    $region26: #{tpu_custom_call.1} parent=1 // pred_check
      _
    $region27: #{tpu_custom_call.1} parent=1 // pred_check_branch
      %449 = sbr.rel (0) target = $region29
    $region28: #{tpu_custom_call.1} parent=1 // pred_region
      %s451 = ssub.s32 2048, 2048
      %452 = vsyncadd [#allocation5], %s451
      %s453 = sshll.u32 [#allocation8], 4
      %s454 = int_to_ptr.vmem [resolvable:$true] %s453
      %459 = dma.vmem_to_hbm [thread:$0]  %s454, 2048, %s2, [#allocation5], 256, 256, 16
    $region29: #{tpu_custom_call.1} parent=1 // pred_fallthru
      _
    // Predicated region
    $region30: #{tpu_custom_call.1} parent=1 // pred_check
      _
    $region31: #{tpu_custom_call.1} parent=1 // pred_check_branch
      %461 = sbr.rel (0) target = $region33
    $region32: #{tpu_custom_call.1} parent=1 // pred_region
      %462 = dma.done [#allocation5], 2048
    $region33: #{tpu_custom_call.1} parent=1 // pred_fallthru
      _
    %463 = vsyncpa [#allocation4], 1
    %464 = vsyncpa [#allocation7], 1
    %465 = vsyncpa [#allocation5], 1

</llo_original>
